<compile_context>
chip_gen: v7x
topology: tpu7x:2x2x1
jax: 0.10.0
libtpu: 0.0.40
codegen_flags: <defaults>
</compile_context>

<pallas_src>
import functools

import jax
import jax.numpy as jnp
from jax import lax
from jax.experimental import pallas as pl
from jax.experimental.pallas import tpu as pltpu


def _capsule_loss_kernel(org_ref, y_ref, pred_ref, rec_ref, out_ref, *,
                         batch, d, tile_b, tile_d, num_dt, inv_batch):
    i = pl.program_id(0)          # row-tile index
    j = pl.program_id(1)          # feature-tile index (usually a single tile)

    # ---- Reconstruction partial SSE for this (row, feature) tile ----
    diff = rec_ref[...].astype(jnp.float32) - org_ref[...].astype(jnp.float32)
    if d % tile_d != 0:
        # Mask garbage lanes of the last (partial) D tile before squaring.
        cols = j * tile_d + lax.broadcasted_iota(jnp.int32, (1, tile_d), 1)
        diff = jnp.where(cols < d, diff, 0.0)
    row_sse = jnp.sum(diff * diff, axis=1, keepdims=True)          # (tile_b, 1)
    if batch % tile_b != 0:
        # Mask garbage rows of the last (partial) row tile (cheap: per-row only;
        # where is a select, so NaN/Inf garbage does not leak through).
        rows = i * tile_b + lax.broadcasted_iota(jnp.int32, (tile_b, 1), 0)
        row_sse = jnp.where(rows < batch, row_sse, 0.0)
    recon = jnp.sum(row_sse) * 0.0005

    # ---- Margin loss for this row tile (small (tile_b, K) blocks) ----
    def margin_sum():
        pred = pred_ref[...].astype(jnp.float32)
        y = y_ref[...].astype(jnp.float32)
        left = jnp.maximum(0.9 - pred, 0.0)
        left = left * left
        right = jnp.maximum(pred - 0.1, 0.0)
        right = right * right
        # y*left + 0.5*(1-y)*right == 0.5*right + y*(left - 0.5*right)
        terms = 0.5 * right + y * (left - 0.5 * right)
        row_m = jnp.sum(terms, axis=1, keepdims=True)               # (tile_b, 1)
        if batch % tile_b != 0:
            rows = i * tile_b + lax.broadcasted_iota(jnp.int32, (tile_b, 1), 0)
            row_m = jnp.where(rows < batch, row_m, 0.0)
        return jnp.sum(row_m)

    if num_dt == 1:
        # Single feature tile: every row tile owns its margin rows.
        total = (recon + margin_sum()) * inv_batch
        out_ref[...] = jnp.full(out_ref.shape, total, dtype=jnp.float32)
    else:
        # Multiple feature tiles: count the margin only on the first D tile,
        # as a cold path that is actually skipped at runtime (pl.when).
        @pl.when(j == 0)
        def _():
            out_ref[...] = jnp.full(out_ref.shape,
                                    (recon + margin_sum()) * inv_batch,
                                    dtype=jnp.float32)

        @pl.when(j != 0)
        def _():
            out_ref[...] = jnp.full(out_ref.shape, recon * inv_batch,
                                    dtype=jnp.float32)


def _hw_params():
    """(per-streamed-input tile budget, vmem_limit cap) per TPU generation."""
    kind = ""
    try:
        kind = jax.devices()[0].device_kind.lower()
    except Exception:
        pass
    if "v5" in kind or "v6" in kind:
        # 128 MiB physical VMEM: larger slabs amortize per-step overhead.
        return 8 * 1024 * 1024, 96 * 1024 * 1024
    # v7x (64 MiB per TC) and unknown: stay conservative.
    return 4 * 1024 * 1024, 48 * 1024 * 1024


def _plan_tiles(batch, d, max_item, min_item, budget):
    """Pick (tile_b, tile_d) so one streamed input tile fits `budget` bytes."""
    pack = max(8, 32 // max(1, min_item))      # 8 f32 / 16 bf16 / 32 int8 rows
    rows = budget // max(1, d * max_item)
    if rows >= batch:
        return batch, d                        # whole batch per tile
    rows = (rows // pack) * pack
    if rows >= pack:
        return rows, d                         # row tiling only
    # Very wide rows: add a feature (D) tile axis.
    tb = batch if batch < pack else pack
    td = budget // max(1, tb * max_item)
    td = max((td // 128) * 128, 128)
    td = min(td, d)
    return tb, td


def capsule_loss(org_data, y_true, pred, reconstr, *,
                 _tile_b_override=None, _tile_d_override=None):
    """JAX/Pallas equivalent of CapsuleLoss.forward(org_data, y_true, pred, reconstr)."""
    batch, d = reconstr.shape
    num_classes = pred.shape[1]
    # Glue: flatten org_data like torch's `org_data.view(reconstr.size(0), -1)`.
    # Keep native dtypes (bf16 stays bf16 over HBM); upcast happens in-kernel.
    org_flat = jnp.reshape(org_data, (batch, d))

    item_org = jnp.dtype(org_flat.dtype).itemsize
    item_rec = jnp.dtype(reconstr.dtype).itemsize
    budget, vmem_cap = _hw_params()
    tile_b, tile_d = _plan_tiles(batch, d, max(item_org, item_rec),
                                 min(item_org, item_rec), budget)
    if _tile_b_override:
        tile_b = _tile_b_override
    if _tile_d_override:
        tile_d = _tile_d_override

    num_bt = pl.cdiv(batch, tile_b)
    num_dt = pl.cdiv(d, tile_d)

    # Real VMEM footprint: 2 streamed inputs x 2 pipeline buffers x tile bytes,
    # plus the small row-tiled pred/y blocks (K pads to 128 lanes) and output,
    # with ~25% headroom, clamped to the per-generation cap.
    streamed = 2 * tile_b * tile_d * (item_org + item_rec)
    resident = 2 * 2 * tile_b * 128 * 4
    outbuf = 2 * 8 * 128 * 4
    vmem_limit = min(vmem_cap,
                     max(int((streamed + resident + outbuf) * 1.25) + (1 << 20),
                         32 * 1024 * 1024))

    bytes_accessed = (org_flat.size * item_org
                      + reconstr.size * item_rec
                      + y_true.size * jnp.dtype(y_true.dtype).itemsize
                      + pred.size * jnp.dtype(pred.dtype).itemsize
                      + num_bt * num_dt * 8 * 128 * 4)
    cost = pl.CostEstimate(
        flops=int(3 * batch * d + 10 * batch * num_classes),
        transcendentals=0,
        bytes_accessed=int(bytes_accessed),
    )

    out = pl.pallas_call(
        functools.partial(_capsule_loss_kernel,
                          batch=batch, d=d, tile_b=tile_b, tile_d=tile_d,
                          num_dt=num_dt, inv_batch=1.0 / batch),
        out_shape=jax.ShapeDtypeStruct((num_bt, num_dt, 8, 128), jnp.float32),
        grid=(num_bt, num_dt),
        in_specs=[
            pl.BlockSpec((tile_b, tile_d), lambda i, j: (i, j)),       # org_flat
            pl.BlockSpec((tile_b, num_classes), lambda i, j: (i, 0)),  # y_true
            pl.BlockSpec((tile_b, num_classes), lambda i, j: (i, 0)),  # pred
            pl.BlockSpec((tile_b, tile_d), lambda i, j: (i, j)),       # reconstr
        ],
        out_specs=pl.BlockSpec((1, 1, 8, 128), lambda i, j: (i, j, 0, 0)),
        compiler_params=pltpu.CompilerParams(
            dimension_semantics=("parallel", "arbitrary"),
            vmem_limit_bytes=vmem_limit,
        ),
        cost_estimate=cost,
    )(org_flat, y_true, pred, reconstr)

    # Trivial final reduction over the handful of per-tile partials (plain JAX).
    return jnp.sum(out[:, :, 0, 0])


def _reference_loss(org_data, y_true, pred, reconstr):
    """Pure-JAX reference mirroring the PyTorch module exactly."""
    batch = reconstr.shape[0]
    org_flat = jnp.reshape(org_data, (batch, -1)).astype(jnp.float32)
    pred = pred.astype(jnp.float32)
    y_true = y_true.astype(jnp.float32)
    left = jnp.maximum(0.9 - pred, 0.0) ** 2
    right = jnp.maximum(pred - 0.1, 0.0) ** 2
    margin_loss = jnp.sum(y_true * left + 0.5 * (1.0 - y_true) * right)
    reconstr_loss = jnp.sum((reconstr.astype(jnp.float32) - org_flat) ** 2) * 0.0005
    return (margin_loss + reconstr_loss) / batch


if __name__ == "__main__":
    key = jax.random.PRNGKey(0)
    k1, k2, k3, k4 = jax.random.split(key, 4)

    B, C, H, W = 2, 4, 16, 16
    NUM_CLASSES = 10
    D = C * H * W

    org_data = jax.random.uniform(k1, (B, C, H, W), dtype=jnp.float32)
    pred = jax.nn.sigmoid(jax.random.normal(k2, (B, NUM_CLASSES), dtype=jnp.float32))
    labels = jax.random.randint(k3, (B,), 0, NUM_CLASSES)
    y_true = jax.nn.one_hot(labels, NUM_CLASSES, dtype=jnp.float32)
    reconstr = jax.random.uniform(k4, (B, D), dtype=jnp.float32)

    # 1) f32 path, single tile.
    loss = jax.block_until_ready(capsule_loss(org_data, y_true, pred, reconstr))
    ref = _reference_loss(org_data, y_true, pred, reconstr)
    assert jnp.allclose(loss, ref, rtol=1e-5, atol=1e-5), (loss, ref)

    # 2) bf16 large inputs streamed natively (no wrapper upcast), f32 accumulation.
    org_bf16 = org_data.astype(jnp.bfloat16)
    rec_bf16 = reconstr.astype(jnp.bfloat16)
    loss_bf16 = jax.block_until_ready(capsule_loss(org_bf16, y_true, pred, rec_bf16))
    ref_bf16 = _reference_loss(org_bf16, y_true, pred, rec_bf16)
    assert jnp.allclose(loss_bf16, ref_bf16, rtol=1e-5, atol=1e-5), (loss_bf16, ref_bf16)

    # 3) Multi row-tile grid + partial last row tile (forced small row tile).
    B2 = 10
    k5, k6, k7, k8 = jax.random.split(jax.random.PRNGKey(1), 4)
    org2 = jax.random.uniform(k5, (B2, C, H, W), dtype=jnp.float32)
    pred2 = jax.nn.sigmoid(jax.random.normal(k6, (B2, NUM_CLASSES), dtype=jnp.float32))
    y2 = jax.nn.one_hot(jax.random.randint(k7, (B2,), 0, NUM_CLASSES), NUM_CLASSES,
                        dtype=jnp.float32)
    rec2 = jax.random.uniform(k8, (B2, D), dtype=jnp.float32)
    loss2 = jax.block_until_ready(
        capsule_loss(org2, y2, pred2, rec2, _tile_b_override=8))
    ref2 = _reference_loss(org2, y2, pred2, rec2)
    assert jnp.allclose(loss2, ref2, rtol=1e-5, atol=1e-5), (loss2, ref2)

    # 4) Feature-dim (D) tiling path with partial last D tile + partial last row
    #    tile + pl.when-gated margin (forced small tiles to exercise the path).
    loss3 = jax.block_until_ready(
        capsule_loss(org2, y2, pred2, rec2, _tile_b_override=8, _tile_d_override=384))
    assert jnp.allclose(loss3, ref2, rtol=1e-5, atol=1e-5), (loss3, ref2)

    print("KERNEL_OK")
</pallas_src>

<mosaic_0001>
module attributes {stable_mosaic.version = 11 : i64} {
  func.func @_capsule_loss_kernel(%arg0: i32, %arg1: i32, %arg2: memref<2x1024xf32, #tpu.memory_space<vmem>>, %arg3: memref<2x10xf32, #tpu.memory_space<vmem>>, %arg4: memref<2x10xf32, #tpu.memory_space<vmem>>, %arg5: memref<2x1024xf32, #tpu.memory_space<vmem>>, %arg6: memref<1x1x8x128xf32, #tpu.memory_space<vmem>>) attributes {dimension_semantics = [#tpu.dimension_semantics<parallel>, #tpu.dimension_semantics<arbitrary>], iteration_bounds = array<i64: 1, 1>, scalar_prefetch = 0 : i64, scratch_operands = 0 : i64, tpu.core_type = #tpu.core_type<tc>, window_params = [{transform_indices = @transform_0, window_bounds = array<i64: 2, 1024>}, {transform_indices = @transform_1, window_bounds = array<i64: 2, 10>}, {transform_indices = @transform_2, window_bounds = array<i64: 2, 10>}, {transform_indices = @transform_3, window_bounds = array<i64: 2, 1024>}, {transform_indices = @transform_4, window_bounds = array<i64: 1, 1, 8, 128>}]} {
    %c0 = arith.constant 0 : index
    %c0_0 = arith.constant 0 : index
    %0 = vector.load %arg5[%c0, %c0_0] : memref<2x1024xf32, #tpu.memory_space<vmem>>, vector<2x1024xf32>
    %c0_1 = arith.constant 0 : index
    %c0_2 = arith.constant 0 : index
    %1 = vector.load %arg2[%c0_1, %c0_2] : memref<2x1024xf32, #tpu.memory_space<vmem>>, vector<2x1024xf32>
    %2 = arith.subf %0, %1 : vector<2x1024xf32>
    %3 = arith.mulf %2, %2 : vector<2x1024xf32>
    %cst = arith.constant dense<0.000000e+00> : vector<2xf32>
    %4 = vector.multi_reduction <add>, %3, %cst [1] : vector<2x1024xf32> to vector<2xf32>
    %5 = vector.shape_cast %4 : vector<2xf32> to vector<2x1xf32>
    %6 = vector.shape_cast %5 : vector<2x1xf32> to vector<1x2x1xf32>
    %cst_3 = arith.constant dense<0.000000e+00> : vector<1xf32>
    %7 = vector.multi_reduction <add>, %6, %cst_3 [1, 2] : vector<1x2x1xf32> to vector<1xf32>
    %8 = vector.shape_cast %7 : vector<1xf32> to vector<1x1x1xf32>
    %9 = vector.extract %8[0, 0, 0] : f32 from vector<1x1x1xf32>
    %cst_4 = arith.constant 5.000000e-04 : f32
    %10 = arith.mulf %9, %cst_4 : f32
    %c0_5 = arith.constant 0 : index
    %c0_6 = arith.constant 0 : index
    %11 = vector.load %arg4[%c0_5, %c0_6] : memref<2x10xf32, #tpu.memory_space<vmem>>, vector<2x10xf32>
    %c0_7 = arith.constant 0 : index
    %c0_8 = arith.constant 0 : index
    %12 = vector.load %arg3[%c0_7, %c0_8] : memref<2x10xf32, #tpu.memory_space<vmem>>, vector<2x10xf32>
    %cst_9 = arith.constant 0.899999976 : f32
    %13 = vector.broadcast %cst_9 : f32 to vector<2x10xf32>
    %14 = arith.subf %13, %11 : vector<2x10xf32>
    %cst_10 = arith.constant 0.000000e+00 : f32
    %15 = vector.broadcast %cst_10 : f32 to vector<2x10xf32>
    %16 = arith.maximumf %14, %15 : vector<2x10xf32>
    %17 = arith.mulf %16, %16 : vector<2x10xf32>
    %cst_11 = arith.constant 1.000000e-01 : f32
    %18 = vector.broadcast %cst_11 : f32 to vector<2x10xf32>
    %19 = arith.subf %11, %18 : vector<2x10xf32>
    %cst_12 = arith.constant 0.000000e+00 : f32
    %20 = vector.broadcast %cst_12 : f32 to vector<2x10xf32>
    %21 = arith.maximumf %19, %20 : vector<2x10xf32>
    %22 = arith.mulf %21, %21 : vector<2x10xf32>
    %cst_13 = arith.constant 5.000000e-01 : f32
    %23 = vector.broadcast %cst_13 : f32 to vector<2x10xf32>
    %24 = arith.mulf %23, %22 : vector<2x10xf32>
    %cst_14 = arith.constant 5.000000e-01 : f32
    %25 = vector.broadcast %cst_14 : f32 to vector<2x10xf32>
    %26 = arith.mulf %25, %22 : vector<2x10xf32>
    %27 = arith.subf %17, %26 : vector<2x10xf32>
    %28 = arith.mulf %12, %27 : vector<2x10xf32>
    %29 = arith.addf %24, %28 : vector<2x10xf32>
    %cst_15 = arith.constant dense<0.000000e+00> : vector<2xf32>
    %30 = vector.multi_reduction <add>, %29, %cst_15 [1] : vector<2x10xf32> to vector<2xf32>
    %31 = vector.shape_cast %30 : vector<2xf32> to vector<2x1xf32>
    %32 = vector.shape_cast %31 : vector<2x1xf32> to vector<1x2x1xf32>
    %cst_16 = arith.constant dense<0.000000e+00> : vector<1xf32>
    %33 = vector.multi_reduction <add>, %32, %cst_16 [1, 2] : vector<1x2x1xf32> to vector<1xf32>
    %34 = vector.shape_cast %33 : vector<1xf32> to vector<1x1x1xf32>
    %35 = vector.extract %34[0, 0, 0] : f32 from vector<1x1x1xf32>
    %36 = arith.addf %10, %35 : f32
    %cst_17 = arith.constant 5.000000e-01 : f32
    %37 = arith.mulf %36, %cst_17 : f32
    %38 = vector.broadcast %37 : f32 to vector<1x1x8x128xf32>
    %c0_18 = arith.constant 0 : index
    %c0_19 = arith.constant 0 : index
    %c0_20 = arith.constant 0 : index
    %c0_21 = arith.constant 0 : index
    %39 = vector.load %arg6[%c0_18, %c0_19, %c0_20, %c0_21] : memref<1x1x8x128xf32, #tpu.memory_space<vmem>>, vector<1x1x8x128xf32>
    tpu.vector_store %arg6[%c0_18, %c0_19, %c0_20, %c0_21], %38 {strides = array<i32>} : memref<1x1x8x128xf32, #tpu.memory_space<vmem>>, vector<1x1x8x128xf32>,
    return
  }
  func.func @transform_0(%arg0: i32, %arg1: i32) -> (i32, i32) {
    %c0_i32 = arith.constant 0 : i32
    return %arg0, %arg1 : i32, i32
  }
  func.func @transform_1(%arg0: i32, %arg1: i32) -> (i32, i32) {
    %c0_i32 = arith.constant 0 : i32
    %c0_i32_0 = arith.constant 0 : i32
    return %arg0, %c0_i32 : i32, i32
  }
  func.func @transform_2(%arg0: i32, %arg1: i32) -> (i32, i32) {
    %c0_i32 = arith.constant 0 : i32
    %c0_i32_0 = arith.constant 0 : i32
    return %arg0, %c0_i32 : i32, i32
  }
  func.func @transform_3(%arg0: i32, %arg1: i32) -> (i32, i32) {
    %c0_i32 = arith.constant 0 : i32
    return %arg0, %arg1 : i32, i32
  }
  func.func @transform_4(%arg0: i32, %arg1: i32) -> (i32, i32, i32, i32) {
    %c0_i32 = arith.constant 0 : i32
    %c0_i32_0 = arith.constant 0 : i32
    %c0_i32_1 = arith.constant 0 : i32
    return %arg0, %arg1, %c0_i32, %c0_i32_0 : i32, i32, i32, i32
  }
}

</mosaic_0001>

<llo_original>
// kernel: tpu_custom_call.1
$region0: #{tpu_custom_call.1}
  #allocation0 [shape = 'u32[]', space=smem, size = 0x4, offset = 0x4, fixed_abs, tag = 'smem constant byte address 0x4 - core index']
  #allocation1 [shape = 'u32[144,128]{1,0:T(1,128)}', space=vmem, size = 0x12000, scoped, tag = 'internal scratch']
  %s0 = inlined_call_operand.hbm [shape: f32[2,1024], index: 0, kind: input, shape index: {}]
  %s1 = inlined_call_operand.vmem [shape: f32[2,10], index: 1, kind: input, shape index: {}]
  %s2 = inlined_call_operand.vmem [shape: f32[2,10], index: 2, kind: input, shape index: {}]
  %s3 = inlined_call_operand.hbm [shape: f32[2,1024], index: 3, kind: input, shape index: {}]
  %s4 = inlined_call_operand.hbm [shape: f32[1,1,8,128], index: 4, kind: output, shape index: {}]
  %s5 = sld [smem:[#allocation0]]
  $region34: #{tpu_custom_call.1} parent=0
    _
  %s7 = ssub.s32 1, %s5
  %s8 = scalar_select 0, %s7, %s5
  $region1: #{tpu_custom_call.1} parent=0
    #allocation2 [shape = 'u8[8192]{0}', space=vmem, size = 0x2000, scoped, tag = 'input window, operand 0, single buffered']
    #allocation3 [shape = 's32[1]{0}', space=sflag, size = 0x4, scoped, tag = 'scoped memory for tpu_custom_call.1']
    #allocation4 [shape = 's32[1]{0}', space=sflag, size = 0x4, scoped, tag = 'scoped memory for tpu_custom_call.1']
    #allocation5 [shape = 'u8[8192]{0}', space=vmem, size = 0x2000, scoped, tag = 'input window, operand 3, single buffered']
    #allocation6 [shape = 's32[1]{0}', space=sflag, size = 0x4, scoped, tag = 'scoped memory for tpu_custom_call.1']
    #allocation7 [shape = 'u8[4096]{0}', space=vmem, size = 0x1000, scoped, tag = 'output window, operand 0, single buffered']
    %9 = vsyncpa [#allocation3], 0
    %10 = vsyncpa [#allocation6], 0
    %11 = vsyncpa [#allocation4], 0
    // Predicated region
    $region2: #{tpu_custom_call.1} parent=1 // pred_check
      _
    $region3: #{tpu_custom_call.1} parent=1 // pred_check_branch
      %13 = sbr.rel (0) target = $region5
    $region4: #{tpu_custom_call.1} parent=1 // pred_region
      %s15 = ssub.s32 256, 256
      %16 = vsyncadd [#allocation3], %s15
      %s18 = sshll.u32 [#allocation2], 4
      %s19 = int_to_ptr.vmem [resolvable:$true] %s18
      %21 = dma.hbm_to_vmem [thread:$0]  %s0, 256, %s19, [#allocation3]
    $region5: #{tpu_custom_call.1} parent=1 // pred_fallthru
      _
    // Predicated region
    $region6: #{tpu_custom_call.1} parent=1 // pred_check
      _
    $region7: #{tpu_custom_call.1} parent=1 // pred_check_branch
      %23 = sbr.rel (0) target = $region9
    $region8: #{tpu_custom_call.1} parent=1 // pred_region
      _
    $region9: #{tpu_custom_call.1} parent=1 // pred_fallthru
      _
    // Predicated region
    $region10: #{tpu_custom_call.1} parent=1 // pred_check
      _
    $region11: #{tpu_custom_call.1} parent=1 // pred_check_branch
      %25 = sbr.rel (0) target = $region13
    $region12: #{tpu_custom_call.1} parent=1 // pred_region
      _
    $region13: #{tpu_custom_call.1} parent=1 // pred_fallthru
      _
    // Predicated region
    $region14: #{tpu_custom_call.1} parent=1 // pred_check
      _
    $region15: #{tpu_custom_call.1} parent=1 // pred_check_branch
      %27 = sbr.rel (0) target = $region17
    $region16: #{tpu_custom_call.1} parent=1 // pred_region
      %s29 = ssub.s32 256, 256
      %30 = vsyncadd [#allocation6], %s29
      %s32 = sshll.u32 [#allocation5], 4
      %s33 = int_to_ptr.vmem [resolvable:$true] %s32
      %35 = dma.hbm_to_vmem [thread:$0]  %s3, 256, %s33, [#allocation6]
    $region17: #{tpu_custom_call.1} parent=1 // pred_fallthru
      _
    // Predicated region
    $region18: #{tpu_custom_call.1} parent=1 // pred_check
      _
    $region19: #{tpu_custom_call.1} parent=1 // pred_check_branch
      %37 = sbr.rel (0) target = $region21
    $region20: #{tpu_custom_call.1} parent=1 // pred_region
      %38 = dma.done [#allocation3], 256
    $region21: #{tpu_custom_call.1} parent=1 // pred_fallthru
      _
    // Predicated region
    $region22: #{tpu_custom_call.1} parent=1 // pred_check
      _
    $region23: #{tpu_custom_call.1} parent=1 // pred_check_branch
      %40 = sbr.rel (0) target = $region25
    $region24: #{tpu_custom_call.1} parent=1 // pred_region
      %41 = dma.done [#allocation6], 256
    $region25: #{tpu_custom_call.1} parent=1 // pred_fallthru
      _
    %v42 = vld [vmem:[#allocation5] sm:$0xff]
    %v43 = vld [vmem:[#allocation5 + $0x8] sm:$0xff]
    %v44 = vld [vmem:[#allocation2] sm:$0xff]
    %v45 = vld [vmem:[#allocation2 + $0x8] sm:$0xff]
    %v46 = vsub.f32 %v42, %v44
    %v47 = vsub.f32 %v43, %v45
    %v48 = vmul.f32 %v46, %v46
    %v49 = vmul.f32 %v47, %v47
    %v52 = vcombine.high %v48, %v48
    %v54 = vunpack.c.l.s4 1983009808
    %v55 = vunpack.c.0.s8 %v54
    %v56 = vlaneseq
    %v57 = vshrl.u32 %v56, 7
    %v58 = vsub.s32 %v55, %v57
    %v59 = vrot.slane %v48, %v58
    %v61 = vunpack.c.l.s4 1983009808
    %v62 = vunpack.c.0.s8 %v61
    %v63 = vlaneseq
    %v64 = vshrl.u32 %v63, 7
    %v65 = vsub.s32 %v62, %v64
    %v66 = vrot.slane %v52, %v65
    %v67 = vcombine.high %v59, %v59
    %v68 = vcombine.high %v66, %v66
    %v69 = vcombine.high %v49, %v49
    %v71 = vunpack.c.l.s4 1983009808
    %v72 = vunpack.c.0.s8 %v71
    %v73 = vlaneseq
    %v74 = vshrl.u32 %v73, 7
    %v75 = vsub.s32 %v72, %v74
    %v76 = vrot.slane %v49, %v75
    %v78 = vunpack.c.l.s4 1983009808
    %v79 = vunpack.c.0.s8 %v78
    %v80 = vlaneseq
    %v81 = vshrl.u32 %v80, 7
    %v82 = vsub.s32 %v79, %v81
    %v83 = vrot.slane %v69, %v82
    %v84 = vcombine.high %v76, %v76
    %v85 = vcombine.high %v83, %v83
    %vm94 = vcmask 1041408
    %v95 = vsel %vm94, %v59, 0.0
    %v96 = vsel %vm94, %v67, 0.0
    %v97 = vadd.f32 %v95, %v96
    %v98 = vsel %vm94, %v66, 0.0
    %v99 = vadd.f32 %v97, %v98
    %v100 = vsel %vm94, %v68, 0.0
    %v101 = vadd.f32 %v99, %v100
    %v102 = vsel %vm94, %v76, 0.0
    %v103 = vadd.f32 %v101, %v102
    %v104 = vsel %vm94, %v84, 0.0
    %v105 = vadd.f32 %v103, %v104
    %v106 = vsel %vm94, %v83, 0.0
    %v107 = vadd.f32 %v105, %v106
    %v108 = vsel %vm94, %v85, 0.0
    %v109 = vadd.f32 %v107, %v108
    %110 = vadd.xlane.f32.xlu0 %v109
    %v111 = vpop.xlane.xlu0 %110
    %vm112 = vcmask 1024
    %v113 = vsel %vm112, %v111, 0.0
    %114 = vadd.xlane.f32.xlu0 %v113
    %v115 = vpop.xlane.xlu0 %114
    %v116 = vrot.slane %v115, 4
    %v117 = vadd.f32 %v115, %v116
    %v118 = vrot.slane %v117, 2
    %v119 = vadd.f32 %v117, %v118
    %v120 = vrot.slane %v119, 1
    %v121 = vadd.f32 %v119, %v120
    %s122 = vtos %v121
    %s123 = smul.f32 %s122, 0.0005
    %v124 = vld [vmem:[%s2] sm:$0x3]
    %v125 = vld [vmem:[%s1] sm:$0x3]
    %v126 = vsub.f32 0.9, %v124
    %v127 = vmax.f32 %v126, 0.0
    %v128 = vmul.f32 %v127, %v127
    %v129 = vsub.f32 %v124, 0.1
    %v130 = vmax.f32 %v129, 0.0
    %v131 = vmul.f32 %v130, %v130
    %v132 = vmul.f32 %v131, 0.5
    %v133 = vsub.f32 %v128, %v132
    %v134 = vmul.f32 %v125, %v133
    %v135 = vadd.f32 %v132, %v134
    %vm136 = vcmask 74752
    %v137 = vsel %vm136, %v135, 0.0
    %138 = vadd.xlane.f32.xlu0 %v137
    %v139 = vpop.xlane.xlu0 %138
    %v140 = vsel %vm112, %v139, 0.0
    %141 = vadd.xlane.f32.xlu0 %v140
    %v142 = vpop.xlane.xlu0 %141
    %v143 = vrot.slane %v142, 4
    %v144 = vadd.f32 %v142, %v143
    %v145 = vrot.slane %v144, 2
    %v146 = vadd.f32 %v144, %v145
    %v147 = vrot.slane %v146, 1
    %v148 = vadd.f32 %v146, %v147
    %s149 = vtos %v148
    %s150 = sadd.f32 %s123, %s149
    %s151 = smul.f32 %s150, 0.5
    %v152 = vstv %s151
    %153 = vst [vmem:[#allocation7] sm:$0xff] %v152
    // Predicated region
    $region26: #{tpu_custom_call.1} parent=1 // pred_check
      _
    $region27: #{tpu_custom_call.1} parent=1 // pred_check_branch
      %155 = sbr.rel (0) target = $region29
    $region28: #{tpu_custom_call.1} parent=1 // pred_region
      %s157 = ssub.s32 128, 128
      %158 = vsyncadd [#allocation4], %s157
      %s160 = sshll.u32 [#allocation7], 4
      %s161 = int_to_ptr.vmem [resolvable:$true] %s160
      %163 = dma.vmem_to_hbm [thread:$0]  %s161, 128, %s4, [#allocation4]
    $region29: #{tpu_custom_call.1} parent=1 // pred_fallthru
      _
    // Predicated region
    $region30: #{tpu_custom_call.1} parent=1 // pred_check
      _
    $region31: #{tpu_custom_call.1} parent=1 // pred_check_branch
      %165 = sbr.rel (0) target = $region33
    $region32: #{tpu_custom_call.1} parent=1 // pred_region
      %166 = dma.done [#allocation4], 128
    $region33: #{tpu_custom_call.1} parent=1 // pred_fallthru
      _
    %167 = vsyncpa [#allocation3], 1
    %168 = vsyncpa [#allocation6], 1
    %169 = vsyncpa [#allocation4], 1

</llo_original>
